<compile_context>
chip_gen: v5e
topology: v5e:2x2
jax: 0.10.0
libtpu: 0.0.40
codegen_flags: <defaults>
</compile_context>

<pallas_src>
import functools
import math

import jax
import jax.numpy as jnp
from jax.experimental import pallas as pl
from jax.experimental.pallas import tpu as pltpu


# --- erf / normal CDF on the VPU --------------------------------------------
# Rational f32 approximation (same coefficients XLA uses for f32 erf), with
# the single divide replaced by an EUP approximate reciprocal plus one Newton
# refinement step (~3 VALU ops instead of the ~8-op f32 divide chain, keeps
# ~1e-7 accuracy).
_ERF_ALPHA = (0.00022905065861350646, 0.0034082910107109506,
              0.050955695062380861, 0.18520832239976145, 1.128379143519084)
_ERF_BETA = (-1.1791602954361697e-07, 2.3547966471313185e-05,
             0.0010179625278914885, 0.014070470171167667,
             0.11098505178285362, 0.49746925110067538, 1.0)
_ERF_CLAMP = 3.832506856900711  # erfinv(1 - 2^-23)


def _normal_cdf_from_scaled(z):
    """Returns 0.5 * (1 + erf(z)) for z = (x - m) / (s * sqrt(2))."""
    z = jnp.clip(z, jnp.float32(-_ERF_CLAMP), jnp.float32(_ERF_CLAMP))
    z2 = z * z
    num = jnp.float32(_ERF_ALPHA[0])
    for a in _ERF_ALPHA[1:]:
        num = num * z2 + jnp.float32(a)
    num = num * z
    den = jnp.float32(_ERF_BETA[0])
    for b in _ERF_BETA[1:]:
        den = den * z2 + jnp.float32(b)
    # Approximate reciprocal runs on the (otherwise idle) EUP slot; one Newton
    # step restores near-full f32 precision with 3 cheap VALU ops.
    r = pl.reciprocal(den, approx=True)
    r = r * (jnp.float32(2.0) - den * r)
    return (jnp.float32(0.5) * num) * r + jnp.float32(0.5)


# ------------------------------ Pallas kernel --------------------------------
def _gauss_norm_kernel(x_ref, o_ref, *, n, n_pad, const_mean, const_std):
    # x_ref block: (block_b, n_pad). Full rows are resident in VMEM, so the
    # per-row mean/std reduction and the elementwise CDF all happen in-kernel.
    x = x_ref[...].astype(jnp.float32)
    inv_sqrt2 = 1.0 / math.sqrt(2.0)

    if const_mean is not None and const_std is not None:
        # Constant-stats path: pure FMA + CDF, no reductions, no divides.
        scale = jnp.float32(inv_sqrt2 / const_std)
        shift = jnp.float32(-const_mean * inv_sqrt2 / const_std)
        z = x * scale + shift
    else:
        masked = n_pad != n
        if masked:
            lane = jax.lax.broadcasted_iota(jnp.int32, x.shape, dimension=1)
            valid = lane < n

        # Single cross-lane mean, reused for centering and for the std.
        xs = jnp.where(valid, x, jnp.float32(0.0)) if masked else x
        mu = jnp.sum(xs, axis=1, keepdims=True) * jnp.float32(1.0 / n)

        if const_std is None:
            # torch.std semantics: unbiased (N-1), centered on the data mean.
            d = x - mu
            ds = jnp.where(valid, d, jnp.float32(0.0)) if masked else d
            var = (jnp.sum(ds * ds, axis=1, keepdims=True)
                   * jnp.float32(1.0 / (n - 1)))
            # Per-row rsqrt on the EUP with 1/sqrt(2) folded in; the N-wide
            # "divide by std" becomes a single multiply.
            inv_s = jax.lax.rsqrt(var) * jnp.float32(inv_sqrt2)
            if const_mean is None:
                z = d * inv_s                      # reuse centered values
            else:
                z = (x - jnp.float32(const_mean)) * inv_s
        else:
            # const_std given, const_mean is None here.
            z = (x - mu) * jnp.float32(inv_sqrt2 / const_std)

    o_ref[...] = _normal_cdf_from_scaled(z).astype(o_ref.dtype)


# --------------------------------- wrapper -----------------------------------
def _vmem_capacity_bytes():
    try:
        return int(pltpu.get_tpu_info().vmem_capacity_bytes)
    except Exception:
        return 64 << 20  # conservative fallback (v7x per-TensorCore VMEM)


def _pick_block_b(B, n_pad, sublane, target_block_bytes):
    """Largest power-of-two multiple of `sublane` dividing B whose f32
    working set stays under `target_block_bytes`."""
    if B % sublane != 0:
        # (8,128) rule: second-to-last block dim must be a multiple of the
        # sublane packing or equal the full batch -> one full-batch block.
        return B
    row_f32_bytes = n_pad * 4  # in-kernel math is f32
    block_b = sublane
    while ((block_b * 2) <= B and B % (block_b * 2) == 0
           and (block_b * 2) * row_f32_bytes <= target_block_bytes):
        block_b *= 2
    # Keep >= 2 grid steps when possible so the "parallel" batch axis can be
    # sharded across the two TensorCores on v7x (free on single-TC v5e/v6e).
    if B // block_b < 2 and block_b >= 2 * sublane:
        block_b //= 2
    return block_b


def gauss_norm_2d(x, const_mean=None, const_std=None):
    """Pallas implementation of GaussNorm2D.forward for x of shape [B, H, W]."""
    assert x.ndim == 3, "Input should be sizes [batch size x height x width]"
    B, H, W = x.shape
    N = H * W
    if const_std is None:
        assert N > 1, "unbiased std over a single element is undefined (NaN)"

    # Lane-align the flattened spatial dim: full-width stores instead of
    # masked partial stores. Padded lanes are masked out of the reductions.
    N_pad = ((N + 127) // 128) * 128
    xf = x.reshape(B, N)
    if N_pad != N:
        xf = jnp.pad(xf, ((0, 0), (0, N_pad - N)))

    itemsize = jnp.dtype(x.dtype).itemsize
    sublane = max(8, 32 // max(itemsize, 1))  # 8 (f32) / 16 (bf16) / 32 (int8)
    vmem_cap = _vmem_capacity_bytes()
    # Bigger blocks on 128 MiB-VMEM parts (v5e/v6e) amortize the ~0.35us
    # per-grid-step overhead; tighter cap on v7x (64 MiB per TensorCore).
    target_block = (16 << 20) if vmem_cap >= (100 << 20) else (4 << 20)
    block_b = _pick_block_b(B, N_pad, sublane, target_block)
    grid = (B // block_b,)

    # Explicit VMEM budget: double-buffered input+output windows plus a few
    # f32 elementwise temporaries, capped below physical VMEM.
    io_block_bytes = block_b * N_pad * itemsize
    f32_block_bytes = block_b * N_pad * 4
    vmem_needed = 4 * io_block_bytes + 6 * f32_block_bytes + (2 << 20)
    vmem_limit = int(min(max(vmem_needed, 16 << 20), int(vmem_cap * 0.9)))
    # TODO(synk): for rows too large to fit VMEM (huge H*W), a two-pass
    # sum/apply scheme over a lane-tiled grid axis would be needed.

    kernel = functools.partial(
        _gauss_norm_kernel, n=N, n_pad=N_pad,
        const_mean=const_mean, const_std=const_std)

    out = pl.pallas_call(
        kernel,
        out_shape=jax.ShapeDtypeStruct((B, N_pad), x.dtype),
        grid=grid,
        in_specs=[pl.BlockSpec((block_b, N_pad), lambda i: (i, 0))],
        out_specs=pl.BlockSpec((block_b, N_pad), lambda i: (i, 0)),
        compiler_params=pltpu.CompilerParams(
            dimension_semantics=("parallel",),
            vmem_limit_bytes=vmem_limit,
        ),
    )(xf)

    if N_pad != N:
        out = out[:, :N]
    return out.reshape(B, H, W)


# -------------------------------- reference ----------------------------------
def _gauss_norm_2d_ref(x, const_mean=None, const_std=None):
    B, H, W = x.shape
    xf = x.reshape(B, -1).astype(jnp.float32)
    m = xf.mean(axis=1, keepdims=True) if const_mean is None else const_mean
    if const_std is None:
        s = jnp.std(xf, axis=1, ddof=1, keepdims=True)
    else:
        s = const_std
    y = 0.5 * (1.0 + jax.scipy.special.erf((xf - m) / (s * jnp.sqrt(2.0))))
    return y.reshape(B, H, W).astype(x.dtype)


if __name__ == "__main__":
    key = jax.random.PRNGKey(0)
    k1, k2, k3 = jax.random.split(key, 3)

    cases = [
        # (shape,        const_mean, const_std)
        ((2, 16, 16),    None,       None),   # lane-aligned, data stats
        ((4, 7, 7),      None,       None),   # N=49 -> padded to 128, masked
        ((2, 16, 16),    1.5,        2.0),    # constant-stats FMA path
    ]
    for (shape, cm, cs), k in zip(cases, (k1, k2, k3)):
        x = jax.random.normal(k, shape, dtype=jnp.float32) * 3.0 + 1.5
        y = jax.block_until_ready(gauss_norm_2d(x, cm, cs))
        y_ref = _gauss_norm_2d_ref(x, cm, cs)
        assert y.shape == shape
        assert jnp.all(y >= 0.0) and jnp.all(y <= 1.0)
        assert jnp.allclose(y, y_ref, atol=2e-5, rtol=2e-5), (
            f"case {(shape, cm, cs)}: max abs err = "
            f"{jnp.max(jnp.abs(y - y_ref))}")

    print("KERNEL_OK")
</pallas_src>

<mosaic_0001>
module attributes {stable_mosaic.version = 11 : i64} {
  func.func @_gauss_norm_kernel(%arg0: i32, %arg1: memref<2x256xf32, #tpu.memory_space<vmem>>, %arg2: memref<2x256xf32, #tpu.memory_space<vmem>>) attributes {dimension_semantics = [#tpu.dimension_semantics<parallel>], iteration_bounds = array<i64: 1>, scalar_prefetch = 0 : i64, scratch_operands = 0 : i64, tpu.core_type = #tpu.core_type<tc>, window_params = [{transform_indices = @transform_0, window_bounds = array<i64: 2, 256>}, {transform_indices = @transform_1, window_bounds = array<i64: 2, 256>}]} {
    %c0 = arith.constant 0 : index
    %c0_0 = arith.constant 0 : index
    %0 = vector.load %arg1[%c0, %c0_0] : memref<2x256xf32, #tpu.memory_space<vmem>>, vector<2x256xf32>
    %cst = arith.constant dense<0.000000e+00> : vector<2xf32>
    %1 = vector.multi_reduction <add>, %0, %cst [1] : vector<2x256xf32> to vector<2xf32>
    %2 = vector.shape_cast %1 : vector<2xf32> to vector<2x1xf32>
    %cst_1 = arith.constant 3.906250e-03 : f32
    %3 = vector.broadcast %cst_1 : f32 to vector<2x1xf32>
    %4 = arith.mulf %2, %3 : vector<2x1xf32>
    %5 = vector.broadcast %4 : vector<2x1xf32> to vector<2x256xf32>
    %6 = arith.subf %0, %5 : vector<2x256xf32>
    %7 = arith.mulf %6, %6 : vector<2x256xf32>
    %cst_2 = arith.constant dense<0.000000e+00> : vector<2xf32>
    %8 = vector.multi_reduction <add>, %7, %cst_2 [1] : vector<2x256xf32> to vector<2xf32>
    %9 = vector.shape_cast %8 : vector<2xf32> to vector<2x1xf32>
    %cst_3 = arith.constant 0.00392156886 : f32
    %10 = vector.broadcast %cst_3 : f32 to vector<2x1xf32>
    %11 = arith.mulf %9, %10 : vector<2x1xf32>
    %12 = math.rsqrt %11 : vector<2x1xf32>
    %cst_4 = arith.constant 0.707106769 : f32
    %13 = vector.broadcast %cst_4 : f32 to vector<2x1xf32>
    %14 = arith.mulf %12, %13 : vector<2x1xf32>
    %15 = vector.broadcast %14 : vector<2x1xf32> to vector<2x256xf32>
    %16 = arith.mulf %6, %15 : vector<2x256xf32>
    %cst_5 = arith.constant -3.8325069 : f32
    %cst_6 = arith.constant 3.8325069 : f32
    %17 = vector.broadcast %cst_5 : f32 to vector<2x256xf32>
    %18 = arith.maximumf %17, %16 : vector<2x256xf32>
    %19 = vector.broadcast %cst_6 : f32 to vector<2x256xf32>
    %20 = arith.minimumf %19, %18 : vector<2x256xf32>
    %21 = arith.mulf %20, %20 : vector<2x256xf32>
    %cst_7 = arith.constant 2.29050653E-4 : f32
    %22 = vector.broadcast %cst_7 : f32 to vector<2x256xf32>
    %23 = arith.mulf %22, %21 : vector<2x256xf32>
    %cst_8 = arith.constant 0.00340829091 : f32
    %24 = vector.broadcast %cst_8 : f32 to vector<2x256xf32>
    %25 = arith.addf %23, %24 : vector<2x256xf32>
    %26 = arith.mulf %25, %21 : vector<2x256xf32>
    %cst_9 = arith.constant 0.0509556942 : f32
    %27 = vector.broadcast %cst_9 : f32 to vector<2x256xf32>
    %28 = arith.addf %26, %27 : vector<2x256xf32>
    %29 = arith.mulf %28, %21 : vector<2x256xf32>
    %cst_10 = arith.constant 0.185208321 : f32
    %30 = vector.broadcast %cst_10 : f32 to vector<2x256xf32>
    %31 = arith.addf %29, %30 : vector<2x256xf32>
    %32 = arith.mulf %31, %21 : vector<2x256xf32>
    %cst_11 = arith.constant 1.12837911 : f32
    %33 = vector.broadcast %cst_11 : f32 to vector<2x256xf32>
    %34 = arith.addf %32, %33 : vector<2x256xf32>
    %35 = arith.mulf %34, %20 : vector<2x256xf32>
    %cst_12 = arith.constant -1.17916031E-7 : f32
    %36 = vector.broadcast %cst_12 : f32 to vector<2x256xf32>
    %37 = arith.mulf %36, %21 : vector<2x256xf32>
    %cst_13 = arith.constant 2.35479656E-5 : f32
    %38 = vector.broadcast %cst_13 : f32 to vector<2x256xf32>
    %39 = arith.addf %37, %38 : vector<2x256xf32>
    %40 = arith.mulf %39, %21 : vector<2x256xf32>
    %cst_14 = arith.constant 0.00101796258 : f32
    %41 = vector.broadcast %cst_14 : f32 to vector<2x256xf32>
    %42 = arith.addf %40, %41 : vector<2x256xf32>
    %43 = arith.mulf %42, %21 : vector<2x256xf32>
    %cst_15 = arith.constant 0.0140704699 : f32
    %44 = vector.broadcast %cst_15 : f32 to vector<2x256xf32>
    %45 = arith.addf %43, %44 : vector<2x256xf32>
    %46 = arith.mulf %45, %21 : vector<2x256xf32>
    %cst_16 = arith.constant 0.110985048 : f32
    %47 = vector.broadcast %cst_16 : f32 to vector<2x256xf32>
    %48 = arith.addf %46, %47 : vector<2x256xf32>
    %49 = arith.mulf %48, %21 : vector<2x256xf32>
    %cst_17 = arith.constant 0.497469246 : f32
    %50 = vector.broadcast %cst_17 : f32 to vector<2x256xf32>
    %51 = arith.addf %49, %50 : vector<2x256xf32>
    %52 = arith.mulf %51, %21 : vector<2x256xf32>
    %cst_18 = arith.constant 1.000000e+00 : f32
    %53 = vector.broadcast %cst_18 : f32 to vector<2x256xf32>
    %54 = arith.addf %52, %53 : vector<2x256xf32>
    %55 = tpu.reciprocal %54 {approx = true} : vector<2x256xf32> -> vector<2x256xf32>
    %56 = arith.mulf %54, %55 : vector<2x256xf32>
    %cst_19 = arith.constant 2.000000e+00 : f32
    %57 = vector.broadcast %cst_19 : f32 to vector<2x256xf32>
    %58 = arith.subf %57, %56 : vector<2x256xf32>
    %59 = arith.mulf %55, %58 : vector<2x256xf32>
    %cst_20 = arith.constant 5.000000e-01 : f32
    %60 = vector.broadcast %cst_20 : f32 to vector<2x256xf32>
    %61 = arith.mulf %60, %35 : vector<2x256xf32>
    %62 = arith.mulf %61, %59 : vector<2x256xf32>
    %cst_21 = arith.constant 5.000000e-01 : f32
    %63 = vector.broadcast %cst_21 : f32 to vector<2x256xf32>
    %64 = arith.addf %62, %63 : vector<2x256xf32>
    %c0_22 = arith.constant 0 : index
    %c0_23 = arith.constant 0 : index
    %65 = vector.load %arg2[%c0_22, %c0_23] : memref<2x256xf32, #tpu.memory_space<vmem>>, vector<2x256xf32>
    tpu.vector_store %arg2[%c0_22, %c0_23], %64 {strides = array<i32>} : memref<2x256xf32, #tpu.memory_space<vmem>>, vector<2x256xf32>,
    return
  }
  func.func @transform_0(%arg0: i32) -> (i32, i32) {
    %c0_i32 = arith.constant 0 : i32
    %c0_i32_0 = arith.constant 0 : i32
    return %arg0, %c0_i32 : i32, i32
  }
  func.func @transform_1(%arg0: i32) -> (i32, i32) {
    %c0_i32 = arith.constant 0 : i32
    %c0_i32_0 = arith.constant 0 : i32
    return %arg0, %c0_i32 : i32, i32
  }
}

</mosaic_0001>

<llo_original>
// kernel: tpu_custom_call.1
$region0: #{tpu_custom_call.1}
  #allocation0 [shape = 'u32[]', space=smem, size = 0x4, offset = 0x4, fixed_abs, tag = 'smem constant byte address 0x4 - core index']
  #allocation1 [shape = 'u32[72,128]{1,0:T(1,128)}', space=vmem, size = 0x9000, scoped, tag = 'internal scratch']
  %s0 = inlined_call_operand.hbm [shape: f32[2,256], index: 0, kind: input, shape index: {}]
  %s1 = inlined_call_operand.hbm [shape: f32[2,256], index: 1, kind: output, shape index: {}]
  %s2 = sld [smem:[#allocation0]]
  $region18: #{tpu_custom_call.1} parent=0
    _
  %s4 = ssub.s32 1, %s2
  %s5 = scalar_select 0, %s4, %s2
  $region1: #{tpu_custom_call.1} parent=0
    #allocation2 [shape = 'u8[2048]{0}', space=vmem, size = 0x800, scoped, tag = 'input window, operand 0, single buffered']
    #allocation3 [shape = 's32[1]{0}', space=sflag, size = 0x4, scoped, tag = 'scoped memory for tpu_custom_call.1']
    #allocation4 [shape = 's32[1]{0}', space=sflag, size = 0x4, scoped, tag = 'scoped memory for tpu_custom_call.1']
    #allocation5 [shape = 'u8[2048]{0}', space=vmem, size = 0x800, scoped, tag = 'output window, operand 0, single buffered']
    %6 = vsyncpa [#allocation3], 0
    %7 = vsyncpa [#allocation4], 0
    // Predicated region
    $region2: #{tpu_custom_call.1} parent=1 // pred_check
      _
    $region3: #{tpu_custom_call.1} parent=1 // pred_check_branch
      %9 = sbr.rel (0) target = $region5
    $region4: #{tpu_custom_call.1} parent=1 // pred_region
      %11 = vsyncadd [#allocation3], 0
      %s13 = sshll.u32 %s0, 4
      %s14 = int_to_ptr.hbm [resolvable:$true] %s13
      %s15 = sshll.u32 [#allocation2], 4
      %s16 = int_to_ptr.vmem [resolvable:$true] %s15
      %18 = dma.hbm_to_vmem [thread:$0]  %s14, 64, %s16, [#allocation3]
    $region5: #{tpu_custom_call.1} parent=1 // pred_fallthru
      _
    // Predicated region
    $region6: #{tpu_custom_call.1} parent=1 // pred_check
      _
    $region7: #{tpu_custom_call.1} parent=1 // pred_check_branch
      %20 = sbr.rel (0) target = $region9
    $region8: #{tpu_custom_call.1} parent=1 // pred_region
      %22 = dma.done [#allocation3], 64
    $region9: #{tpu_custom_call.1} parent=1 // pred_fallthru
      _
    %v23 = vld [vmem:[#allocation2] sm:$0xf]
    %25 = vst [vmem:[#allocation1] ss:$4 sm:$0xff] %v23
    %v26 = vld.sshfl [vmem:[#allocation1] sm:$0xff pattern:$0x73625140]
    %v27 = vld.sshfl [vmem:[#allocation1 + $0x8] sm:$0xff pattern:$0x73625140]
    %vm30 = vcmask 1041408
    %v31 = vsel %vm30, %v26, 0.0
    %v32 = vsel %vm30, %v27, 0.0
    %v33 = vadd.f32 %v31, %v32
    %34 = vadd.xlane.f32.xlu0 %v33
    %v35 = vpop.xlane.xlu0 %34
    %v36 = vmul.f32 %v35, 0.00390625
    %v39 = vunpack.c.l.s4 269488144
    %v40 = vunpack.c.0.s8 %v39
    %v41 = vperm.slane %v36, %v40
    %v43 = vsub.f32 %v23, %v41
    %v44 = vmul.f32 %v43, %v43
    %46 = vst [vmem:[#allocation1] ss:$4 sm:$0xff] %v44
    %v47 = vld.sshfl [vmem:[#allocation1] sm:$0xff pattern:$0x73625140]
    %v48 = vld.sshfl [vmem:[#allocation1 + $0x8] sm:$0xff pattern:$0x73625140]
    %v51 = vsel %vm30, %v47, 0.0
    %v52 = vsel %vm30, %v48, 0.0
    %v53 = vadd.f32 %v51, %v52
    %54 = vadd.xlane.f32.xlu0 %v53
    %v55 = vpop.xlane.xlu0 %54
    %v56 = vmul.f32 %v55, 0.003921569
    %v57 = vrsqrt.pop %v56
    %v58 = vmul.f32 %v57, %v56
    %v59 = vmul.f32 %v58, %v57
    %v60 = vmul.f32 0.5, %v59
    %v61 = vsub.f32 1.5, %v60
    %v62 = vmul.f32 %v57, %v61
    %vm63 = vweird.f32 %v56
    %vm64 = vweird.f32 %v57
    %vm65 = vmor %vm63, %vm64
    %v66 = vsel %vm65, %v57, %v62
    %v67 = vmul.f32 %v66, 0.70710677
    %v70 = vunpack.c.l.s4 269488144
    %v71 = vunpack.c.0.s8 %v70
    %v72 = vperm.slane %v67, %v71
    %v74 = vmul.f32 %v43, %v72
    %v75 = vmax.f32 %v74, -3.832507
    %v76 = vmin.f32 %v75, 3.832507
    %v77 = vmul.f32 %v76, %v76
    %v78 = vmul.f32 %v77, 0.00022905065
    %v79 = vadd.f32 %v78, 0.003408291
    %v80 = vmul.f32 %v79, %v77
    %v81 = vadd.f32 %v80, 0.050955694
    %v82 = vmul.f32 %v81, %v77
    %v83 = vadd.f32 %v82, 0.18520832
    %v84 = vmul.f32 %v83, %v77
    %v85 = vadd.f32 %v84, 1.1283791
    %v86 = vmul.f32 %v85, %v76
    %v87 = vmul.f32 %v77, -1.1791603e-07
    %v88 = vadd.f32 %v87, 2.3547966e-05
    %v89 = vmul.f32 %v88, %v77
    %v90 = vadd.f32 %v89, 0.0010179626
    %v91 = vmul.f32 %v90, %v77
    %v92 = vadd.f32 %v91, 0.01407047
    %v93 = vmul.f32 %v92, %v77
    %v94 = vadd.f32 %v93, 0.11098505
    %v95 = vmul.f32 %v94, %v77
    %v96 = vadd.f32 %v95, 0.49746925
    %v97 = vmul.f32 %v96, %v77
    %v98 = vadd.f32 %v97, 1.0
    %v99 = vrcp.pop %v98
    %v100 = vmul.f32 %v98, %v99
    %v101 = vsub.f32 2.0, %v100
    %v102 = vmul.f32 %v99, %v101
    %v103 = vmul.f32 %v86, 0.5
    %v104 = vmul.f32 %v103, %v102
    %v105 = vadd.f32 %v104, 0.5
    %106 = vst [vmem:[#allocation5] sm:$0xf] %v105
    // Predicated region
    $region10: #{tpu_custom_call.1} parent=1 // pred_check
      _
    $region11: #{tpu_custom_call.1} parent=1 // pred_check_branch
      %108 = sbr.rel (0) target = $region13
    $region12: #{tpu_custom_call.1} parent=1 // pred_region
      %110 = vsyncadd [#allocation4], 0
      %s112 = sshll.u32 [#allocation5], 4
      %s113 = int_to_ptr.vmem [resolvable:$true] %s112
      %s114 = sshll.u32 %s1, 4
      %s115 = int_to_ptr.hbm [resolvable:$true] %s114
      %117 = dma.vmem_to_hbm [thread:$0]  %s113, 64, %s115, [#allocation4]
    $region13: #{tpu_custom_call.1} parent=1 // pred_fallthru
      _
    // Predicated region
    $region14: #{tpu_custom_call.1} parent=1 // pred_check
      _
    $region15: #{tpu_custom_call.1} parent=1 // pred_check_branch
      %119 = sbr.rel (0) target = $region17
    $region16: #{tpu_custom_call.1} parent=1 // pred_region
      %121 = dma.done [#allocation4], 64
    $region17: #{tpu_custom_call.1} parent=1 // pred_fallthru
      _
    %122 = vsyncpa [#allocation3], 1
    %123 = vsyncpa [#allocation4], 1

</llo_original>
